<compile_context>
chip_gen: v5e
topology: v5e:2x2
jax: 0.10.0
libtpu: 0.0.40
codegen_flags: <defaults>
</compile_context>

<pallas_src>
import functools

import jax
import jax.numpy as jnp
from jax.experimental import pallas as pl
from jax.experimental.pallas import tpu as pltpu


def linearized_mlp_kernel(x_ref, w1cat_ref, b1_0_ref, db1_ref,
                          w2_0_ref, w2_ref, b2_ref, o_ref, *, use_bf16_mxu):
    H = b1_0_ref.shape[1]
    x = x_ref[...]
    w1cat = w1cat_ref[...]                               # (D_in, 2H) resident

    if use_bf16_mxu:
        x_mx = x.astype(jnp.bfloat16)
        w1cat = w1cat.astype(jnp.bfloat16)
    else:
        x_mx = x

    # ---- layer 1: primal + tangent in a single wide MXU call ---------------
    zcat = jnp.dot(x_mx, w1cat, preferred_element_type=jnp.float32)  # (TB, 2H)
    z1 = zcat[:, :H] + b1_0_ref[...]                     # x @ W1_0 + b1_0
    dz1 = zcat[:, H:] + db1_ref[...]                     # x @ dW1  + db1
    a1 = jnp.maximum(z1, 0.0)                            # relu(z1)
    # Note: jax.jvp of maximum splits the tangent 50/50 at exact ties
    # (z1 == 0); strict > is used here (irrelevant for generic float inputs).
    da1 = jnp.where(z1 > 0.0, dz1, 0.0)                  # relu'(z1) * dz1

    # ---- layer 2: algebraic rewrite, no concats / no dW2 --------------------
    #   out + dout = a1 @ W2 + da1 @ W2_0 + b2      (b2_0 + db2 == b2)
    w2_0 = w2_0_ref[...]
    w2 = w2_ref[...]
    if use_bf16_mxu:
        a1_mx = a1.astype(jnp.bfloat16)
        da1_mx = da1.astype(jnp.bfloat16)
        w2_0 = w2_0.astype(jnp.bfloat16)
        w2 = w2.astype(jnp.bfloat16)
    else:
        a1_mx, da1_mx = a1, da1

    y = (jnp.dot(a1_mx, w2, preferred_element_type=jnp.float32)
         + jnp.dot(da1_mx, w2_0, preferred_element_type=jnp.float32)
         + b2_ref[...])

    o_ref[...] = y.astype(o_ref.dtype)


def linearized_forward(x, params0, params, *, block_b=512, use_bf16_mxu=False):
    """params0 / params: dicts w1 (D_in,H), b1 (1,H), w2 (H,D_out), b2 (1,D_out)."""
    w1_0, b1_0, w2_0 = params0["w1"], params0["b1"], params0["w2"]
    w1, b1, w2, b2 = params["w1"], params["b1"], params["w2"], params["b2"]
    # b2_0 is never needed separately: b2_0 + (b2 - b2_0) == b2.

    B, D_in = x.shape
    H = w1_0.shape[1]
    D_out = w2_0.shape[1]
    # Lane-dim guard: keeps the in-kernel [:, :H] / [:, H:] slices tile-aligned
    # and the output stores dense (unmasked vst).
    assert H % 128 == 0 and D_out % 128 == 0, "H and D_out must be multiples of 128"

    # dtheta / layer-1 concat hoisted out of the per-grid-step path (XLA runs
    # this once per forward, not once per grid step).
    w1cat = jnp.concatenate([w1_0, w1 - w1_0], axis=1)    # (D_in, 2H)
    db1 = b1 - b1_0                                       # (1, H)

    # Batch tile: as large as practical; round to sublane multiple. Ragged
    # last block is handled by Pallas masked boundary writes (no jnp.pad).
    tb = min(block_b, B)
    if tb < B:
        tb = max(8, (tb // 8) * 8)
    nb = pl.cdiv(B, tb)

    def resident(shape):
        # Constant index_map -> block stays VMEM-resident across grid steps.
        return pl.BlockSpec(shape, lambda i: (0, 0))

    grid_spec = pltpu.PrefetchScalarGridSpec(
        num_scalar_prefetch=0,
        grid=(nb,),
        in_specs=[
            pl.BlockSpec((tb, D_in), lambda i: (i, 0)),   # x (batch-tiled)
            resident((D_in, 2 * H)),                      # [W1_0 | dW1]
            resident((1, H)), resident((1, H)),           # b1_0, db1
            resident((H, D_out)), resident((H, D_out)),   # W2_0, W2
            resident((1, D_out)),                         # b2 (trainable only)
        ],
        out_specs=pl.BlockSpec((tb, D_out), lambda i: (i, 0)),
    )

    # VMEM budget: double-buffered x/out tiles + (default double-buffered)
    # resident weights + in-kernel f32 temporaries.
    isz = 4
    est = isz * (2 * tb * D_in + 2 * tb * D_out
                 + 2 * (D_in * 2 * H + 2 * H * D_out + 2 * H + D_out)
                 + tb * 2 * H + 4 * tb * H + tb * D_out)
    try:
        vmem_cap = pltpu.get_tpu_info().vmem_capacity_bytes
    except Exception:
        vmem_cap = 64 * 2**20                             # conservative (v7x)
    vmem_limit = int(min(max(2 * est, 16 * 2**20), int(0.70 * vmem_cap)))

    cost = pl.CostEstimate(
        flops=4 * B * D_in * H + 4 * B * H * D_out,
        transcendentals=0,
        bytes_accessed=isz * (B * (D_in + D_out)
                              + D_in * 2 * H + 2 * H * D_out
                              + 2 * H + D_out),
    )

    kernel = functools.partial(linearized_mlp_kernel, use_bf16_mxu=use_bf16_mxu)

    return pl.pallas_call(
        kernel,
        out_shape=jax.ShapeDtypeStruct((B, D_out), jnp.float32),
        grid_spec=grid_spec,
        compiler_params=pltpu.CompilerParams(
            dimension_semantics=("parallel",),            # megacore on v7x
            vmem_limit_bytes=vmem_limit,
        ),
        cost_estimate=cost,
    )(x, w1cat, b1_0, db1, w2_0, w2, b2)


def reference_forward(x, params0, params):
    """Pure-JAX reference: f(theta0,x) + JVP_theta f(theta0,x)[theta - theta0]."""
    def f(p, x):
        z1 = x @ p["w1"] + p["b1"]
        a1 = jnp.maximum(z1, 0.0)
        return a1 @ p["w2"] + p["b2"]

    dparams = {k: params[k] - params0[k] for k in params0}
    out, dp = jax.jvp(lambda p: f(p, x), (params0,), (dparams,))
    return out + dp


if __name__ == "__main__":
    # Small but lane-friendly shapes (feature dims multiples of 128).
    B, D_in, H, D_out = 256, 128, 128, 128

    key = jax.random.PRNGKey(0)
    k = jax.random.split(key, 9)

    x = jax.random.normal(k[0], (B, D_in), dtype=jnp.float32)

    # theta0 (frozen init params) and theta (trainable params), slightly different.
    params0 = {
        "w1": jax.random.normal(k[1], (D_in, H), dtype=jnp.float32) * 0.1,
        "b1": jax.random.normal(k[2], (1, H), dtype=jnp.float32) * 0.1,
        "w2": jax.random.normal(k[3], (H, D_out), dtype=jnp.float32) * 0.1,
        "b2": jax.random.normal(k[4], (1, D_out), dtype=jnp.float32) * 0.1,
    }
    params = {
        "w1": params0["w1"] + jax.random.normal(k[5], (D_in, H), dtype=jnp.float32) * 0.01,
        "b1": params0["b1"] + jax.random.normal(k[6], (1, H), dtype=jnp.float32) * 0.01,
        "w2": params0["w2"] + jax.random.normal(k[7], (H, D_out), dtype=jnp.float32) * 0.01,
        "b2": params0["b2"] + jax.random.normal(k[8], (1, D_out), dtype=jnp.float32) * 0.01,
    }

    # block_b=128 -> grid=(2,): both TensorCores fed on v7x, and only two
    # (negligible-overhead) serial steps on single-TC v5e/v6e.
    y = linearized_forward(x, params0, params, block_b=128)
    y = jax.block_until_ready(y)

    y_ref = reference_forward(x, params0, params)
    assert y.shape == (B, D_out)
    assert jnp.allclose(y, y_ref, atol=1e-4, rtol=1e-4), "mismatch vs JAX jvp reference"

    print("KERNEL_OK")
</pallas_src>

<mosaic_0001>
module attributes {stable_mosaic.version = 11 : i64} {
  func.func @linearized_mlp_kernel(%arg0: i32, %arg1: memref<128x128xf32, #tpu.memory_space<vmem>>, %arg2: memref<128x256xf32, #tpu.memory_space<vmem>>, %arg3: memref<1x128xf32, #tpu.memory_space<vmem>>, %arg4: memref<1x128xf32, #tpu.memory_space<vmem>>, %arg5: memref<128x128xf32, #tpu.memory_space<vmem>>, %arg6: memref<128x128xf32, #tpu.memory_space<vmem>>, %arg7: memref<1x128xf32, #tpu.memory_space<vmem>>, %arg8: memref<128x128xf32, #tpu.memory_space<vmem>>) attributes {dimension_semantics = [#tpu.dimension_semantics<parallel>], iteration_bounds = array<i64: 2>, scalar_prefetch = 0 : i64, scratch_operands = 0 : i64, tpu.core_type = #tpu.core_type<tc>, window_params = [{transform_indices = @transform_0, window_bounds = array<i64: 128, 128>}, {pipeline_mode = #tpu.pipeline_mode<synchronous>, transform_indices = @transform_1, window_bounds = array<i64: 128, 256>}, {pipeline_mode = #tpu.pipeline_mode<synchronous>, transform_indices = @transform_2, window_bounds = array<i64: 1, 128>}, {pipeline_mode = #tpu.pipeline_mode<synchronous>, transform_indices = @transform_3, window_bounds = array<i64: 1, 128>}, {pipeline_mode = #tpu.pipeline_mode<synchronous>, transform_indices = @transform_4, window_bounds = array<i64: 128, 128>}, {pipeline_mode = #tpu.pipeline_mode<synchronous>, transform_indices = @transform_5, window_bounds = array<i64: 128, 128>}, {pipeline_mode = #tpu.pipeline_mode<synchronous>, transform_indices = @transform_6, window_bounds = array<i64: 1, 128>}, {transform_indices = @transform_7, window_bounds = array<i64: 128, 128>}]} {
    %c0 = arith.constant 0 : index
    %c0_0 = arith.constant 0 : index
    %0 = vector.load %arg1[%c0, %c0_0] : memref<128x128xf32, #tpu.memory_space<vmem>>, vector<128x128xf32>
    %c0_1 = arith.constant 0 : index
    %c0_2 = arith.constant 0 : index
    %1 = vector.load %arg2[%c0_1, %c0_2] : memref<128x256xf32, #tpu.memory_space<vmem>>, vector<128x256xf32>
    %cst = arith.constant dense<0.000000e+00> : vector<128x256xf32>
    %2 = tpu.matmul %0, %1, %cst {dimension_numbers = #tpu.dot_dimension_numbers<[1], [0], [0], [1], [0, 0, 1, 1], [], []>} : vector<128x128xf32>, vector<128x256xf32>, vector<128x256xf32> -> vector<128x256xf32>
    %3 = vector.extract_strided_slice %2 {offsets = [0, 0], sizes = [128, 128], strides = [1, 1]} : vector<128x256xf32> to vector<128x128xf32>
    %c0_3 = arith.constant 0 : index
    %c0_4 = arith.constant 0 : index
    %4 = vector.load %arg3[%c0_3, %c0_4] : memref<1x128xf32, #tpu.memory_space<vmem>>, vector<1x128xf32>
    %5 = vector.broadcast %4 : vector<1x128xf32> to vector<128x128xf32>
    %6 = arith.addf %3, %5 : vector<128x128xf32>
    %7 = vector.extract_strided_slice %2 {offsets = [0, 128], sizes = [128, 128], strides = [1, 1]} : vector<128x256xf32> to vector<128x128xf32>
    %c0_5 = arith.constant 0 : index
    %c0_6 = arith.constant 0 : index
    %8 = vector.load %arg4[%c0_5, %c0_6] : memref<1x128xf32, #tpu.memory_space<vmem>>, vector<1x128xf32>
    %9 = vector.broadcast %8 : vector<1x128xf32> to vector<128x128xf32>
    %10 = arith.addf %7, %9 : vector<128x128xf32>
    %cst_7 = arith.constant 0.000000e+00 : f32
    %11 = vector.broadcast %cst_7 : f32 to vector<128x128xf32>
    %12 = arith.maximumf %6, %11 : vector<128x128xf32>
    %cst_8 = arith.constant 0.000000e+00 : f32
    %13 = vector.broadcast %cst_8 : f32 to vector<128x128xf32>
    %14 = arith.cmpf ogt, %6, %13 : vector<128x128xf32>
    %cst_9 = arith.constant 0.000000e+00 : f32
    %15 = vector.broadcast %cst_9 : f32 to vector<128x128xf32>
    %16 = arith.select %14, %10, %15 : vector<128x128xi1>, vector<128x128xf32>
    %c0_10 = arith.constant 0 : index
    %c0_11 = arith.constant 0 : index
    %17 = vector.load %arg5[%c0_10, %c0_11] : memref<128x128xf32, #tpu.memory_space<vmem>>, vector<128x128xf32>
    %c0_12 = arith.constant 0 : index
    %c0_13 = arith.constant 0 : index
    %18 = vector.load %arg6[%c0_12, %c0_13] : memref<128x128xf32, #tpu.memory_space<vmem>>, vector<128x128xf32>
    %cst_14 = arith.constant dense<0.000000e+00> : vector<128x128xf32>
    %19 = tpu.matmul %12, %18, %cst_14 {dimension_numbers = #tpu.dot_dimension_numbers<[1], [0], [0], [1], [0, 0, 1, 1], [], []>} : vector<128x128xf32>, vector<128x128xf32>, vector<128x128xf32> -> vector<128x128xf32>
    %cst_15 = arith.constant dense<0.000000e+00> : vector<128x128xf32>
    %20 = tpu.matmul %16, %17, %cst_15 {dimension_numbers = #tpu.dot_dimension_numbers<[1], [0], [0], [1], [0, 0, 1, 1], [], []>} : vector<128x128xf32>, vector<128x128xf32>, vector<128x128xf32> -> vector<128x128xf32>
    %21 = arith.addf %19, %20 : vector<128x128xf32>
    %c0_16 = arith.constant 0 : index
    %c0_17 = arith.constant 0 : index
    %22 = vector.load %arg7[%c0_16, %c0_17] : memref<1x128xf32, #tpu.memory_space<vmem>>, vector<1x128xf32>
    %23 = vector.broadcast %22 : vector<1x128xf32> to vector<128x128xf32>
    %24 = arith.addf %21, %23 : vector<128x128xf32>
    %c0_18 = arith.constant 0 : index
    %c0_19 = arith.constant 0 : index
    %25 = vector.load %arg8[%c0_18, %c0_19] : memref<128x128xf32, #tpu.memory_space<vmem>>, vector<128x128xf32>
    tpu.vector_store %arg8[%c0_18, %c0_19], %24 {strides = array<i32>} : memref<128x128xf32, #tpu.memory_space<vmem>>, vector<128x128xf32>,
    return
  }
  func.func @transform_0(%arg0: i32) -> (i32, i32) {
    %c0_i32 = arith.constant 0 : i32
    %c0_i32_0 = arith.constant 0 : i32
    return %arg0, %c0_i32 : i32, i32
  }
  func.func @transform_1(%arg0: i32) -> (i32, i32) {
    %c0_i32 = arith.constant 0 : i32
    %c0_i32_0 = arith.constant 0 : i32
    %c0_i32_1 = arith.constant 0 : i32
    return %c0_i32, %c0_i32_0 : i32, i32
  }
  func.func @transform_2(%arg0: i32) -> (i32, i32) {
    %c0_i32 = arith.constant 0 : i32
    %c0_i32_0 = arith.constant 0 : i32
    %c0_i32_1 = arith.constant 0 : i32
    return %c0_i32, %c0_i32_0 : i32, i32
  }
  func.func @transform_3(%arg0: i32) -> (i32, i32) {
    %c0_i32 = arith.constant 0 : i32
    %c0_i32_0 = arith.constant 0 : i32
    %c0_i32_1 = arith.constant 0 : i32
    return %c0_i32, %c0_i32_0 : i32, i32
  }
  func.func @transform_4(%arg0: i32) -> (i32, i32) {
    %c0_i32 = arith.constant 0 : i32
    %c0_i32_0 = arith.constant 0 : i32
    %c0_i32_1 = arith.constant 0 : i32
    return %c0_i32, %c0_i32_0 : i32, i32
  }
  func.func @transform_5(%arg0: i32) -> (i32, i32) {
    %c0_i32 = arith.constant 0 : i32
    %c0_i32_0 = arith.constant 0 : i32
    %c0_i32_1 = arith.constant 0 : i32
    return %c0_i32, %c0_i32_0 : i32, i32
  }
  func.func @transform_6(%arg0: i32) -> (i32, i32) {
    %c0_i32 = arith.constant 0 : i32
    %c0_i32_0 = arith.constant 0 : i32
    %c0_i32_1 = arith.constant 0 : i32
    return %c0_i32, %c0_i32_0 : i32, i32
  }
  func.func @transform_7(%arg0: i32) -> (i32, i32) {
    %c0_i32 = arith.constant 0 : i32
    %c0_i32_0 = arith.constant 0 : i32
    return %arg0, %c0_i32 : i32, i32
  }
}

</mosaic_0001>

<llo_original>
// kernel: tpu_custom_call.1
$region0: #{tpu_custom_call.1}
  #allocation0 [shape = 'u32[]', space=smem, size = 0x4, offset = 0x4, fixed_abs, tag = 'smem constant byte address 0x4 - core index']
  #allocation1 [shape = 'u32[72,128]{1,0:T(1,128)}', space=vmem, size = 0x9000, scoped, tag = 'internal scratch']
  %s0 = inlined_call_operand.hbm [shape: f32[256,128], index: 0, kind: input, shape index: {}]
  %s1 = inlined_call_operand.hbm [shape: f32[128,256], index: 1, kind: input, shape index: {}]
  %s2 = inlined_call_operand.vmem [shape: f32[1,128], index: 2, kind: input, shape index: {}]
  %s3 = inlined_call_operand.vmem [shape: f32[1,128], index: 3, kind: input, shape index: {}]
  %s4 = inlined_call_operand.hbm [shape: f32[128,128], index: 4, kind: input, shape index: {}]
  %s5 = inlined_call_operand.hbm [shape: f32[128,128], index: 5, kind: input, shape index: {}]
  %s6 = inlined_call_operand.vmem [shape: f32[1,128], index: 6, kind: input, shape index: {}]
  %s7 = inlined_call_operand.hbm [shape: f32[256,128], index: 7, kind: output, shape index: {}]
  %s8 = sld [smem:[#allocation0]]
  $region77: #{tpu_custom_call.1} parent=0
    _
  %s10 = ssub.s32 1, %s8
  %s11 = scalar_select 0, %s10, %s8
  $region1: #{tpu_custom_call.1} parent=0
    #allocation2 [shape = 'u8[131072]{0}', space=vmem, size = 0x20000, scoped, tag = 'input window, operand 0']
    #allocation3 [shape = 's32[2]{0}', space=sflag, size = 0x8, scoped, tag = 'scoped memory for tpu_custom_call.1']
    #allocation4 [shape = 's32[2]{0}', space=sflag, size = 0x8, scoped, tag = 'scoped memory for tpu_custom_call.1']
    #allocation5 [shape = 'u8[131072]{0}', space=vmem, size = 0x20000, scoped, tag = 'input window, operand 1, single buffered']
    #allocation6 [shape = 's32[1]{0}', space=sflag, size = 0x4, scoped, tag = 'scoped memory for tpu_custom_call.1']
    #allocation7 [shape = 'u8[65536]{0}', space=vmem, size = 0x10000, scoped, tag = 'input window, operand 4, single buffered']
    #allocation8 [shape = 'u8[65536]{0}', space=vmem, size = 0x10000, scoped, tag = 'input window, operand 5, single buffered']
    #allocation9 [shape = 's32[1]{0}', space=sflag, size = 0x4, scoped, tag = 'scoped memory for tpu_custom_call.1']
    #allocation10 [shape = 'u8[131072]{0}', space=vmem, size = 0x20000, scoped, tag = 'output window, operand 0']
    %12 = vsyncpa [#allocation3], 0
    %s13 = scalar_lea.sflag [#allocation3], 1
    %14 = vsyncpa %s13, 0
    %15 = vsyncpa [#allocation6], 0
    %16 = vsyncpa [#allocation9], 0
    %17 = vsyncpa [#allocation4], 0
    %s18 = scalar_lea.sflag [#allocation4], 1
    %19 = vsyncpa %s18, 0
    loop: start=0, step=1, limit=4
    $region2: #{tpu_custom_call.1} parent=1 // loop_pre_header
      _
    $region3: #{tpu_custom_call.1} parent=1 // loop_header
      %s21 = sphi 0, %s25
      %p22 = scmp.ge.s32.totalorder %s21, 4
      %s31 = sphi 0, %s33
      %s34 = sphi 0, %s31
      %s35 = sphi 0, %s34
      %s51 = sphi 0, %s35
      %s55 = sphi 0, %s55
      %s57 = sphi 0, %s55
      %s58 = sphi 0, %s57
      %s72 = sphi 0, %s58
      %s76 = sphi 0, %s76
      %s78 = sphi 0, %s76
      %s79 = sphi 0, %s78
      %s93 = sphi 0, %s79
      %s97 = sphi 0, %s97
      %s99 = sphi 0, %s97
      %s100 = sphi 0, %s99
      %s114 = sphi 0, %s100
      %s118 = sphi 0, %s118
      %s120 = sphi 0, %s118
      %s121 = sphi 0, %s120
      %s135 = sphi 0, %s121
      %s139 = sphi 0, %s139
      %s141 = sphi 0, %s139
      %s142 = sphi 0, %s141
      %s156 = sphi 0, %s142
      %s160 = sphi 0, %s160
      %s162 = sphi 0, %s160
      %s163 = sphi 0, %s162
      %s177 = sphi 0, %s163
      %s183 = sphi 0, %s185
      %s186 = sphi 0, %s183
      %s187 = sphi 0, %s186
      %s203 = sphi 0, %s187
    $region4: #{tpu_custom_call.1} parent=1 // loop_header_branch
      %24 = sbr.rel (%p22) target = $region8
    $region5: #{tpu_custom_call.1} parent=1 // loop_body
      %s26 = ssub.s32 %s21, 1
      %s27 = ssub.s32 %s21, 2
      %s28 = sadd.s32 %s21, 1
      %s29 = ssub.s32 %s21, %s28
      %p30 = scmp.eq.s32.totalorder %s29, 0
      %s32 = sadd.s32 %s31, 1
      %s33 = scalar_select %p30, %s31, %s32
      %p36 = pneg %p30
      %p37 = scmp.eq.s32.totalorder %s21, 1
      %p38 = por %p36, %p37
      %p39 = scmp.ne.s32.totalorder %s31, %s34
      %p40 = scmp.eq.s32.totalorder %s21, 0
      %p41 = por %p39, %p40
      %p42 = scmp.ne.s32.totalorder %s31, %s34
      %p43 = scmp.eq.s32.totalorder %s26, 1
      %p44 = por %p42, %p43
      %p45 = scmp.ne.s32.totalorder %s34, %s35
      %p46 = scmp.eq.s32.totalorder %s26, 0
      %p47 = por %p45, %p46
      %p48 = scmp.ne.s32.totalorder %s34, %s35
      %p49 = scmp.eq.s32.totalorder %s27, 1
      %p50 = por %p48, %p49
      %p52 = scmp.ne.s32.totalorder %s35, %s51
      %p53 = scmp.eq.s32.totalorder %s27, 0
      %p54 = por %p52, %p53
      %s56 = sadd.s32 %s55, 1
      %p59 = scmp.eq.s32.totalorder %s21, 1
      %p60 = scmp.ne.s32.totalorder %s55, %s57
      %p61 = scmp.eq.s32.totalorder %s21, 0
      %p62 = por %p60, %p61
      %p63 = scmp.ne.s32.totalorder %s55, %s57
      %p64 = scmp.eq.s32.totalorder %s26, 1
      %p65 = por %p63, %p64
      %p66 = scmp.ne.s32.totalorder %s57, %s58
      %p67 = scmp.eq.s32.totalorder %s26, 0
      %p68 = por %p66, %p67
      %p69 = scmp.ne.s32.totalorder %s57, %s58
      %p70 = scmp.eq.s32.totalorder %s27, 1
      %p71 = por %p69, %p70
      %p73 = scmp.ne.s32.totalorder %s58, %s72
      %p74 = scmp.eq.s32.totalorder %s27, 0
      %p75 = por %p73, %p74
      %s77 = sadd.s32 %s76, 1
      %p80 = scmp.eq.s32.totalorder %s21, 1
      %p81 = scmp.ne.s32.totalorder %s76, %s78
      %p82 = scmp.eq.s32.totalorder %s21, 0
      %p83 = por %p81, %p82
      %p84 = scmp.ne.s32.totalorder %s76, %s78
      %p85 = scmp.eq.s32.totalorder %s26, 1
      %p86 = por %p84, %p85
      %p87 = scmp.ne.s32.totalorder %s78, %s79
      %p88 = scmp.eq.s32.totalorder %s26, 0
      %p89 = por %p87, %p88
      %p90 = scmp.ne.s32.totalorder %s78, %s79
      %p91 = scmp.eq.s32.totalorder %s27, 1
      %p92 = por %p90, %p91
      %p94 = scmp.ne.s32.totalorder %s79, %s93
      %p95 = scmp.eq.s32.totalorder %s27, 0
      %p96 = por %p94, %p95
      %s98 = sadd.s32 %s97, 1
      %p101 = scmp.eq.s32.totalorder %s21, 1
      %p102 = scmp.ne.s32.totalorder %s97, %s99
      %p103 = scmp.eq.s32.totalorder %s21, 0
      %p104 = por %p102, %p103
      %p105 = scmp.ne.s32.totalorder %s97, %s99
      %p106 = scmp.eq.s32.totalorder %s26, 1
      %p107 = por %p105, %p106
      %p108 = scmp.ne.s32.totalorder %s99, %s100
      %p109 = scmp.eq.s32.totalorder %s26, 0
      %p110 = por %p108, %p109
      %p111 = scmp.ne.s32.totalorder %s99, %s100
      %p112 = scmp.eq.s32.totalorder %s27, 1
      %p113 = por %p111, %p112
      %p115 = scmp.ne.s32.totalorder %s100, %s114
      %p116 = scmp.eq.s32.totalorder %s27, 0
      %p117 = por %p115, %p116
      %s119 = sadd.s32 %s118, 1
      %p122 = scmp.eq.s32.totalorder %s21, 1
      %p123 = scmp.ne.s32.totalorder %s118, %s120
      %p124 = scmp.eq.s32.totalorder %s21, 0
      %p125 = por %p123, %p124
      %p126 = scmp.ne.s32.totalorder %s118, %s120
      %p127 = scmp.eq.s32.totalorder %s26, 1
      %p128 = por %p126, %p127
      %p129 = scmp.ne.s32.totalorder %s120, %s121
      %p130 = scmp.eq.s32.totalorder %s26, 0
      %p131 = por %p129, %p130
      %p132 = scmp.ne.s32.totalorder %s120, %s121
      %p133 = scmp.eq.s32.totalorder %s27, 1
      %p134 = por %p132, %p133
      %p136 = scmp.ne.s32.totalorder %s121, %s135
      %p137 = scmp.eq.s32.totalorder %s27, 0
      %p138 = por %p136, %p137
      %s140 = sadd.s32 %s139, 1
      %p143 = scmp.eq.s32.totalorder %s21, 1
      %p144 = scmp.ne.s32.totalorder %s139, %s141
      %p145 = scmp.eq.s32.totalorder %s21, 0
      %p146 = por %p144, %p145
      %p147 = scmp.ne.s32.totalorder %s139, %s141
      %p148 = scmp.eq.s32.totalorder %s26, 1
      %p149 = por %p147, %p148
      %p150 = scmp.ne.s32.totalorder %s141, %s142
      %p151 = scmp.eq.s32.totalorder %s26, 0
      %p152 = por %p150, %p151
      %p153 = scmp.ne.s32.totalorder %s141, %s142
      %p154 = scmp.eq.s32.totalorder %s27, 1
      %p155 = por %p153, %p154
      %p157 = scmp.ne.s32.totalorder %s142, %s156
      %p158 = scmp.eq.s32.totalorder %s27, 0
      %p159 = por %p157, %p158
      %s161 = sadd.s32 %s160, 1
      %p164 = scmp.eq.s32.totalorder %s21, 1
      %p165 = scmp.ne.s32.totalorder %s160, %s162
      %p166 = scmp.eq.s32.totalorder %s21, 0
      %p167 = por %p165, %p166
      %p168 = scmp.ne.s32.totalorder %s160, %s162
      %p169 = scmp.eq.s32.totalorder %s26, 1
      %p170 = por %p168, %p169
      %p171 = scmp.ne.s32.totalorder %s162, %s163
      %p172 = scmp.eq.s32.totalorder %s26, 0
      %p173 = por %p171, %p172
      %p174 = scmp.ne.s32.totalorder %s162, %s163
      %p175 = scmp.eq.s32.totalorder %s27, 1
      %p176 = por %p174, %p175
      %p178 = scmp.ne.s32.totalorder %s163, %s177
      %p179 = scmp.eq.s32.totalorder %s27, 0
      %p180 = por %p178, %p179
      %s181 = ssub.s32 %s21, %s28
      %p182 = scmp.eq.s32.totalorder %s181, 0
      %s184 = sadd.s32 %s183, 1
      %s185 = scalar_select %p182, %s183, %s184
      %p188 = pneg %p182
      %p189 = scmp.eq.s32.totalorder %s21, 1
      %p190 = por %p188, %p189
      %p191 = scmp.ne.s32.totalorder %s183, %s186
      %p192 = scmp.eq.s32.totalorder %s21, 0
      %p193 = por %p191, %p192
      %p194 = scmp.ne.s32.totalorder %s183, %s186
      %p195 = scmp.eq.s32.totalorder %s26, 1
      %p196 = por %p194, %p195
      %p197 = scmp.ne.s32.totalorder %s186, %s187
      %p198 = scmp.eq.s32.totalorder %s26, 0
      %p199 = por %p197, %p198
      %p200 = scmp.ne.s32.totalorder %s186, %s187
      %p201 = scmp.eq.s32.totalorder %s27, 1
      %p202 = por %p200, %p201
      %p204 = scmp.ne.s32.totalorder %s187, %s203
      %p205 = scmp.eq.s32.totalorder %s27, 0
      %p206 = por %p204, %p205
      %p207 = scmp.le.s32.totalorder 1, %s21
      %p208 = scmp.lt.s32.totalorder %s21, 3
      %p209 = pnand %p207, %p208
      %p210 = pneg %p209
      // Predicated region
      $region9: #{tpu_custom_call.1} parent=5 // pred_check
        _
      $region10: #{tpu_custom_call.1} parent=5 // pred_check_branch
        %212 = sbr.rel (%p209) target = $region12
      $region11: #{tpu_custom_call.1} parent=5 // pred_region
        %s213 = ssub.s32 %s21, 1
        // Predicated region
        $region13: #{tpu_custom_call.1} parent=11 // pred_check
          %p214 = pneg %p68
        $region14: #{tpu_custom_call.1} parent=11 // pred_check_branch
          %216 = sbr.rel (%p214) target = $region16
        $region15: #{tpu_custom_call.1} parent=11 // pred_region
          %218 = vsyncadd [#allocation6], 0
          %s219 = sshll.u32 %s1, 4
          %s220 = int_to_ptr.hbm [resolvable:$true] %s219
          %s221 = sshll.u32 [#allocation5], 4
          %s222 = int_to_ptr.vmem [resolvable:$true] %s221
          %227 = dma.hbm_to_vmem [thread:$0]  %s220, 4096, %s222, [#allocation6], 256, 256, 16
        $region16: #{tpu_custom_call.1} parent=11 // pred_fallthru
          _
        // Predicated region
        $region17: #{tpu_custom_call.1} parent=11 // pred_check
          %p228 = pneg %p89
        $region18: #{tpu_custom_call.1} parent=11 // pred_check_branch
          %230 = sbr.rel (%p228) target = $region20
        $region19: #{tpu_custom_call.1} parent=11 // pred_region
          _
        $region20: #{tpu_custom_call.1} parent=11 // pred_fallthru
          _
        // Predicated region
        $region21: #{tpu_custom_call.1} parent=11 // pred_check
          %p231 = pneg %p110
        $region22: #{tpu_custom_call.1} parent=11 // pred_check_branch
          %233 = sbr.rel (%p231) target = $region24
        $region23: #{tpu_custom_call.1} parent=11 // pred_region
          _
        $region24: #{tpu_custom_call.1} parent=11 // pred_fallthru
          _
        // Predicated region
        $region25: #{tpu_custom_call.1} parent=11 // pred_check
          %p234 = pneg %p131
        $region26: #{tpu_custom_call.1} parent=11 // pred_check_branch
          %236 = sbr.rel (%p234) target = $region28
        $region27: #{tpu_custom_call.1} parent=11 // pred_region
          %238 = vsyncadd [#allocation6], 0
          %s239 = sshll.u32 %s4, 4
          %s240 = int_to_ptr.hbm [resolvable:$true] %s239
          %s241 = sshll.u32 [#allocation7], 4
          %s242 = int_to_ptr.vmem [resolvable:$true] %s241
          %247 = dma.hbm_to_vmem [thread:$0]  %s240, 2048, %s242, [#allocation6], 128, 128, 8
        $region28: #{tpu_custom_call.1} parent=11 // pred_fallthru
          _
        // Predicated region
        $region29: #{tpu_custom_call.1} parent=11 // pred_check
          %p248 = pneg %p152
        $region30: #{tpu_custom_call.1} parent=11 // pred_check_branch
          %250 = sbr.rel (%p248) target = $region32
        $region31: #{tpu_custom_call.1} parent=11 // pred_region
          %252 = vsyncadd [#allocation9], 0
          %s253 = sshll.u32 %s5, 4
          %s254 = int_to_ptr.hbm [resolvable:$true] %s253
          %s255 = sshll.u32 [#allocation8], 4
          %s256 = int_to_ptr.vmem [resolvable:$true] %s255
          %261 = dma.hbm_to_vmem [thread:$0]  %s254, 2048, %s256, [#allocation9], 128, 128, 8
        $region32: #{tpu_custom_call.1} parent=11 // pred_fallthru
          _
        // Predicated region
        $region33: #{tpu_custom_call.1} parent=11 // pred_check
          %p262 = pneg %p173
        $region34: #{tpu_custom_call.1} parent=11 // pred_check_branch
          %264 = sbr.rel (%p262) target = $region36
        $region35: #{tpu_custom_call.1} parent=11 // pred_region
          _
        $region36: #{tpu_custom_call.1} parent=11 // pred_fallthru
          _
      $region12: #{tpu_custom_call.1} parent=5 // pred_fallthru
        _
      %p265 = scmp.lt.s32.totalorder %s21, 2
      // Predicated region
      $region37: #{tpu_custom_call.1} parent=5 // pred_check
        %p266 = pneg %p265
      $region38: #{tpu_custom_call.1} parent=5 // pred_check_branch
        %268 = sbr.rel (%p266) target = $region40
      $region39: #{tpu_custom_call.1} parent=5 // pred_region
        // Predicated region
        $region41: #{tpu_custom_call.1} parent=39 // pred_check
          %p269 = pneg %p41
        $region42: #{tpu_custom_call.1} parent=39 // pred_check_branch
          %271 = sbr.rel (%p269) target = $region44
        $region43: #{tpu_custom_call.1} parent=39 // pred_region
          %s272 = sand.u32 %s31, 1
          %s273 = scalar_lea.sflag [#allocation3], %s272
          %s274 = sand.u32 %s31, 1
          %s275 = smul.addr %s274, 128
          %s276 = scalar_lea.vmem [#allocation2], %s275
          %s277 = smul.u32 16, %s21
          %279 = vsyncadd %s273, 0
          %s280 = smul.addr %s277, 8
          %s281 = scalar_lea.hbm %s0, %s280
          %s282 = sshll.u32 %s281, 4
          %s283 = int_to_ptr.hbm [resolvable:$true] %s282
          %s284 = sshll.u32 %s276, 4
          %s285 = int_to_ptr.vmem [resolvable:$true] %s284
          %290 = dma.hbm_to_vmem [thread:$0]  %s283, 2048, %s285, %s273, 128, 128, 8
        $region44: #{tpu_custom_call.1} parent=39 // pred_fallthru
          _
      $region40: #{tpu_custom_call.1} parent=5 // pred_fallthru
        _
      %p291 = scmp.le.s32.totalorder 1, %s21
      %p292 = scmp.lt.s32.totalorder %s21, 3
      %p293 = pnand %p291, %p292
      %p294 = pneg %p293
      // Predicated region
      $region45: #{tpu_custom_call.1} parent=5 // pred_check
        _
      $region46: #{tpu_custom_call.1} parent=5 // pred_check_branch
        %296 = sbr.rel (%p293) target = $region48
      $region47: #{tpu_custom_call.1} parent=5 // pred_region
        %s297 = ssub.s32 %s21, 1
        %s298 = sand.u32 %s34, 1
        %s299 = scalar_lea.sflag [#allocation3], %s298
        %s300 = sand.u32 %s34, 1
        %s301 = smul.addr %s300, 128
        %s302 = scalar_lea.vmem [#allocation2], %s301
        // Predicated region
        $region49: #{tpu_custom_call.1} parent=47 // pred_check
          %p303 = pneg %p47
        $region50: #{tpu_custom_call.1} parent=47 // pred_check_branch
          %305 = sbr.rel (%p303) target = $region52
        $region51: #{tpu_custom_call.1} parent=47 // pred_region
          %307 = dma.done %s299, 2048
        $region52: #{tpu_custom_call.1} parent=47 // pred_fallthru
          _
        // Predicated region
        $region53: #{tpu_custom_call.1} parent=47 // pred_check
          %p308 = pneg %p68
        $region54: #{tpu_custom_call.1} parent=47 // pred_check_branch
          %310 = sbr.rel (%p308) target = $region56
        $region55: #{tpu_custom_call.1} parent=47 // pred_region
          %312 = dma.done [#allocation6], 4096
        $region56: #{tpu_custom_call.1} parent=47 // pred_fallthru
          _
        // Predicated region
        $region57: #{tpu_custom_call.1} parent=47 // pred_check
          %p313 = pneg %p131
        $region58: #{tpu_custom_call.1} parent=47 // pred_check_branch
          %315 = sbr.rel (%p313) target = $region60
        $region59: #{tpu_custom_call.1} parent=47 // pred_region
          %317 = dma.done [#allocation6], 2048
        $region60: #{tpu_custom_call.1} parent=47 // pred_fallthru
          _
        // Predicated region
        $region61: #{tpu_custom_call.1} parent=47 // pred_check
          %p318 = pneg %p152
        $region62: #{tpu_custom_call.1} parent=47 // pred_check_branch
          %320 = sbr.rel (%p318) target = $region64
        $region63: #{tpu_custom_call.1} parent=47 // pred_region
          %322 = dma.done [#allocation9], 2048
        $region64: #{tpu_custom_call.1} parent=47 // pred_fallthru
          _
        %s323 = sand.u32 %s34, 1
        %s324 = scalar_lea.sflag [#allocation3], %s323
        %s325 = sand.u32 %s34, 1
        %s326 = smul.addr %s325, 128
        %s327 = scalar_lea.vmem [#allocation2], %s326
        %p328 = pneg %p47
        %p329 = pneg %p44
        %p330 = pneg %p68
        %p331 = pneg %p65
        %p332 = pneg %p89
        %p333 = pneg %p86
        %p334 = pneg %p110
        %p335 = pneg %p107
        %p336 = pneg %p131
        %p337 = pneg %p128
        %p338 = pneg %p152
        %p339 = pneg %p149
        %p340 = pneg %p173
        %p341 = pneg %p170
        %p342 = pneg %p199
        %p343 = pneg %p196
        %s344 = sand.u32 %s186, 1
        %s345 = scalar_lea.sflag [#allocation4], %s344
        %s346 = sand.u32 %s186, 1
        %s347 = smul.addr %s346, 128
        %s348 = scalar_lea.vmem [#allocation10], %s347
        %s349 = smul.u32 16, %s26
        %s350 = smul.u32 16, %s26
        %v351 = vld [vmem:[%s302] sm:$0xff]
        %v352 = vld [vmem:[%s302 + $0x8] sm:$0xff]
        %v353 = vld [vmem:[%s302 + $0x10] sm:$0xff]
        %v354 = vld [vmem:[%s302 + $0x18] sm:$0xff]
        %v355 = vld [vmem:[%s302 + $0x20] sm:$0xff]
        %v356 = vld [vmem:[%s302 + $0x28] sm:$0xff]
        %v357 = vld [vmem:[%s302 + $0x30] sm:$0xff]
        %v358 = vld [vmem:[%s302 + $0x38] sm:$0xff]
        %v359 = vld [vmem:[%s302 + $0x40] sm:$0xff]
        %v360 = vld [vmem:[%s302 + $0x48] sm:$0xff]
        %v361 = vld [vmem:[%s302 + $0x50] sm:$0xff]
        %v362 = vld [vmem:[%s302 + $0x58] sm:$0xff]
        %v363 = vld [vmem:[%s302 + $0x60] sm:$0xff]
        %v364 = vld [vmem:[%s302 + $0x68] sm:$0xff]
        %v365 = vld [vmem:[%s302 + $0x70] sm:$0xff]
        %v366 = vld [vmem:[%s302 + $0x78] sm:$0xff]
        %v367 = vld [vmem:[#allocation5] sm:$0xff]
        %v368 = vld [vmem:[#allocation5 + $0x8] sm:$0xff]
        %v369 = vld [vmem:[#allocation5 + $0x10] sm:$0xff]
        %v370 = vld [vmem:[#allocation5 + $0x18] sm:$0xff]
        %v371 = vld [vmem:[#allocation5 + $0x20] sm:$0xff]
        %v372 = vld [vmem:[#allocation5 + $0x28] sm:$0xff]
        %v373 = vld [vmem:[#allocation5 + $0x30] sm:$0xff]
        %v374 = vld [vmem:[#allocation5 + $0x38] sm:$0xff]
        %v375 = vld [vmem:[#allocation5 + $0x40] sm:$0xff]
        %v376 = vld [vmem:[#allocation5 + $0x48] sm:$0xff]
        %v377 = vld [vmem:[#allocation5 + $0x50] sm:$0xff]
        %v378 = vld [vmem:[#allocation5 + $0x58] sm:$0xff]
        %v379 = vld [vmem:[#allocation5 + $0x60] sm:$0xff]
        %v380 = vld [vmem:[#allocation5 + $0x68] sm:$0xff]
        %v381 = vld [vmem:[#allocation5 + $0x70] sm:$0xff]
        %v382 = vld [vmem:[#allocation5 + $0x78] sm:$0xff]
        %v383 = vld [vmem:[#allocation5 + $0x80] sm:$0xff]
        %v384 = vld [vmem:[#allocation5 + $0x88] sm:$0xff]
        %v385 = vld [vmem:[#allocation5 + $0x90] sm:$0xff]
        %v386 = vld [vmem:[#allocation5 + $0x98] sm:$0xff]
        %v387 = vld [vmem:[#allocation5 + $0xa0] sm:$0xff]
        %v388 = vld [vmem:[#allocation5 + $0xa8] sm:$0xff]
        %v389 = vld [vmem:[#allocation5 + $0xb0] sm:$0xff]
        %v390 = vld [vmem:[#allocation5 + $0xb8] sm:$0xff]
        %v391 = vld [vmem:[#allocation5 + $0xc0] sm:$0xff]
        %v392 = vld [vmem:[#allocation5 + $0xc8] sm:$0xff]
        %v393 = vld [vmem:[#allocation5 + $0xd0] sm:$0xff]
        %v394 = vld [vmem:[#allocation5 + $0xd8] sm:$0xff]
        %v395 = vld [vmem:[#allocation5 + $0xe0] sm:$0xff]
        %v396 = vld [vmem:[#allocation5 + $0xe8] sm:$0xff]
        %v397 = vld [vmem:[#allocation5 + $0xf0] sm:$0xff]
        %v398 = vld [vmem:[#allocation5 + $0xf8] sm:$0xff]
        %399 = vmatpush.msra.mxu0 %v397
        %400 = vmatpush.msra.mxu0 %v395
        %401 = vmatpush.msra.mxu0 %v393
        %402 = vmatpush.msra.mxu0 %v391
        %403 = vmatpush.msra.mxu0 %v389
        %404 = vmatpush.msra.mxu0 %v387
        %405 = vmatpush.msra.mxu0 %v385
        %406 = vmatpush.msra.mxu0 %v383
        %407 = vmatpush.msra.mxu0 %v381
        %408 = vmatpush.msra.mxu0 %v379
        %409 = vmatpush.msra.mxu0 %v377
        %410 = vmatpush.msra.mxu0 %v375
        %411 = vmatpush.msra.mxu0 %v373
        %412 = vmatpush.msra.mxu0 %v371
        %413 = vmatpush.msra.mxu0 %v369
        %414 = vmatpush.msra.mxu0 %v367
        %415 = vmatmul.f32.gmra.mxu0 %v351
        %v416 = vpop.f32.mrf.mxu0
        %v417 = vadd.f32 0.0, %v416
        %418 = vmatmul.f32.gmra.mxu0 %v352
        %v419 = vpop.f32.mrf.mxu0
        %v420 = vadd.f32 0.0, %v419
        %421 = vmatmul.f32.gmra.mxu0 %v353
        %v422 = vpop.f32.mrf.mxu0
        %v423 = vadd.f32 0.0, %v422
        %424 = vmatmul.f32.gmra.mxu0 %v354
        %v425 = vpop.f32.mrf.mxu0
        %v426 = vadd.f32 0.0, %v425
        %427 = vmatmul.f32.gmra.mxu0 %v355
        %v428 = vpop.f32.mrf.mxu0
        %v429 = vadd.f32 0.0, %v428
        %430 = vmatmul.f32.gmra.mxu0 %v356
        %v431 = vpop.f32.mrf.mxu0
        %v432 = vadd.f32 0.0, %v431
        %433 = vmatmul.f32.gmra.mxu0 %v357
        %v434 = vpop.f32.mrf.mxu0
        %v435 = vadd.f32 0.0, %v434
        %436 = vmatmul.f32.gmra.mxu0 %v358
        %v437 = vpop.f32.mrf.mxu0
        %v438 = vadd.f32 0.0, %v437
        %439 = vmatmul.f32.gmra.mxu0 %v359
        %v440 = vpop.f32.mrf.mxu0
        %v441 = vadd.f32 0.0, %v440
        %442 = vmatmul.f32.gmra.mxu0 %v360
        %v443 = vpop.f32.mrf.mxu0
        %v444 = vadd.f32 0.0, %v443
        %445 = vmatmul.f32.gmra.mxu0 %v361
        %v446 = vpop.f32.mrf.mxu0
        %v447 = vadd.f32 0.0, %v446
        %448 = vmatmul.f32.gmra.mxu0 %v362
        %v449 = vpop.f32.mrf.mxu0
        %v450 = vadd.f32 0.0, %v449
        %451 = vmatmul.f32.gmra.mxu0 %v363
        %v452 = vpop.f32.mrf.mxu0
        %v453 = vadd.f32 0.0, %v452
        %454 = vmatmul.f32.gmra.mxu0 %v364
        %v455 = vpop.f32.mrf.mxu0
        %v456 = vadd.f32 0.0, %v455
        %457 = vmatmul.f32.gmra.mxu0 %v365
        %v458 = vpop.f32.mrf.mxu0
        %v459 = vadd.f32 0.0, %v458
        %460 = vmatmul.f32.gmra.mxu0 %v366
        %v461 = vpop.f32.mrf.mxu0
        %v462 = vadd.f32 0.0, %v461
        %463 = vdwg.mxu0
        %464 = vmatpush.msra.mxu0 %v398
        %465 = vmatpush.msra.mxu0 %v396
        %466 = vmatpush.msra.mxu0 %v394
        %467 = vmatpush.msra.mxu0 %v392
        %468 = vmatpush.msra.mxu0 %v390
        %469 = vmatpush.msra.mxu0 %v388
        %470 = vmatpush.msra.mxu0 %v386
        %471 = vmatpush.msra.mxu0 %v384
        %472 = vmatpush.msra.mxu0 %v382
        %473 = vmatpush.msra.mxu0 %v380
        %474 = vmatpush.msra.mxu0 %v378
        %475 = vmatpush.msra.mxu0 %v376
        %476 = vmatpush.msra.mxu0 %v374
        %477 = vmatpush.msra.mxu0 %v372
        %478 = vmatpush.msra.mxu0 %v370
        %479 = vmatpush.msra.mxu0 %v368
        %480 = vmatmul.f32.gmra.mxu0 %v351
        %v481 = vpop.f32.mrf.mxu0
        %v482 = vadd.f32 0.0, %v481
        %483 = vmatmul.f32.gmra.mxu0 %v352
        %v484 = vpop.f32.mrf.mxu0
        %v485 = vadd.f32 0.0, %v484
        %486 = vmatmul.f32.gmra.mxu0 %v353
        %v487 = vpop.f32.mrf.mxu0
        %v488 = vadd.f32 0.0, %v487
        %489 = vmatmul.f32.gmra.mxu0 %v354
        %v490 = vpop.f32.mrf.mxu0
        %v491 = vadd.f32 0.0, %v490
        %492 = vmatmul.f32.gmra.mxu0 %v355
        %v493 = vpop.f32.mrf.mxu0
        %v494 = vadd.f32 0.0, %v493
        %495 = vmatmul.f32.gmra.mxu0 %v356
        %v496 = vpop.f32.mrf.mxu0
        %v497 = vadd.f32 0.0, %v496
        %498 = vmatmul.f32.gmra.mxu0 %v357
        %v499 = vpop.f32.mrf.mxu0
        %v500 = vadd.f32 0.0, %v499
        %501 = vmatmul.f32.gmra.mxu0 %v358
        %v502 = vpop.f32.mrf.mxu0
        %v503 = vadd.f32 0.0, %v502
        %504 = vmatmul.f32.gmra.mxu0 %v359
        %v505 = vpop.f32.mrf.mxu0
        %v506 = vadd.f32 0.0, %v505
        %507 = vmatmul.f32.gmra.mxu0 %v360
        %v508 = vpop.f32.mrf.mxu0
        %v509 = vadd.f32 0.0, %v508
        %510 = vmatmul.f32.gmra.mxu0 %v361
        %v511 = vpop.f32.mrf.mxu0
        %v512 = vadd.f32 0.0, %v511
        %513 = vmatmul.f32.gmra.mxu0 %v362
        %v514 = vpop.f32.mrf.mxu0
        %v515 = vadd.f32 0.0, %v514
        %516 = vmatmul.f32.gmra.mxu0 %v363
        %v517 = vpop.f32.mrf.mxu0
        %v518 = vadd.f32 0.0, %v517
        %519 = vmatmul.f32.gmra.mxu0 %v364
        %v520 = vpop.f32.mrf.mxu0
        %v521 = vadd.f32 0.0, %v520
        %522 = vmatmul.f32.gmra.mxu0 %v365
        %v523 = vpop.f32.mrf.mxu0
        %v524 = vadd.f32 0.0, %v523
        %525 = vmatmul.f32.gmra.mxu0 %v366
        %v526 = vpop.f32.mrf.mxu0
        %v527 = vadd.f32 0.0, %v526
        %528 = vdwg.mxu0
        %v529 = vld [vmem:[%s2] sm:$0x1]
        %v531 = vperm.slane %v529, 0
        %v533 = vadd.f32 %v417, %v531
        %v534 = vadd.f32 %v420, %v531
        %v535 = vadd.f32 %v423, %v531
        %v536 = vadd.f32 %v426, %v531
        %v537 = vadd.f32 %v429, %v531
        %v538 = vadd.f32 %v432, %v531
        %v539 = vadd.f32 %v435, %v531
        %v540 = vadd.f32 %v438, %v531
        %v541 = vadd.f32 %v441, %v531
        %v542 = vadd.f32 %v444, %v531
        %v543 = vadd.f32 %v447, %v531
        %v544 = vadd.f32 %v450, %v531
        %v545 = vadd.f32 %v453, %v531
        %v546 = vadd.f32 %v456, %v531
        %v547 = vadd.f32 %v459, %v531
        %v548 = vadd.f32 %v462, %v531
        %v549 = vld [vmem:[%s3] sm:$0x1]
        %v551 = vperm.slane %v549, 0
        %v553 = vadd.f32 %v482, %v551
        %v554 = vadd.f32 %v485, %v551
        %v555 = vadd.f32 %v488, %v551
        %v556 = vadd.f32 %v491, %v551
        %v557 = vadd.f32 %v494, %v551
        %v558 = vadd.f32 %v497, %v551
        %v559 = vadd.f32 %v500, %v551
        %v560 = vadd.f32 %v503, %v551
        %v561 = vadd.f32 %v506, %v551
        %v562 = vadd.f32 %v509, %v551
        %v563 = vadd.f32 %v512, %v551
        %v564 = vadd.f32 %v515, %v551
        %v565 = vadd.f32 %v518, %v551
        %v566 = vadd.f32 %v521, %v551
        %v567 = vadd.f32 %v524, %v551
        %v568 = vadd.f32 %v527, %v551
        %v569 = vmax.f32 %v533, 0.0
        %v570 = vmax.f32 %v534, 0.0
        %v571 = vmax.f32 %v535, 0.0
        %v572 = vmax.f32 %v536, 0.0
        %v573 = vmax.f32 %v537, 0.0
        %v574 = vmax.f32 %v538, 0.0
        %v575 = vmax.f32 %v539, 0.0
        %v576 = vmax.f32 %v540, 0.0
        %v577 = vmax.f32 %v541, 0.0
        %v578 = vmax.f32 %v542, 0.0
        %v579 = vmax.f32 %v543, 0.0
        %v580 = vmax.f32 %v544, 0.0
        %v581 = vmax.f32 %v545, 0.0
        %v582 = vmax.f32 %v546, 0.0
        %v583 = vmax.f32 %v547, 0.0
        %v584 = vmax.f32 %v548, 0.0
        %vm585 = vcmp.gt.f32.partialorder %v533, 0.0
        %vm586 = vcmp.gt.f32.partialorder %v534, 0.0
        %vm587 = vcmp.gt.f32.partialorder %v535, 0.0
        %vm588 = vcmp.gt.f32.partialorder %v536, 0.0
        %vm589 = vcmp.gt.f32.partialorder %v537, 0.0
        %vm590 = vcmp.gt.f32.partialorder %v538, 0.0
        %vm591 = vcmp.gt.f32.partialorder %v539, 0.0
        %vm592 = vcmp.gt.f32.partialorder %v540, 0.0
        %vm593 = vcmp.gt.f32.partialorder %v541, 0.0
        %vm594 = vcmp.gt.f32.partialorder %v542, 0.0
        %vm595 = vcmp.gt.f32.partialorder %v543, 0.0
        %vm596 = vcmp.gt.f32.partialorder %v544, 0.0
        %vm597 = vcmp.gt.f32.partialorder %v545, 0.0
        %vm598 = vcmp.gt.f32.partialorder %v546, 0.0
        %vm599 = vcmp.gt.f32.partialorder %v547, 0.0
        %vm600 = vcmp.gt.f32.partialorder %v548, 0.0
        %v601 = vsel %vm585, %v553, 0.0
        %v602 = vsel %vm586, %v554, 0.0
        %v603 = vsel %vm587, %v555, 0.0
        %v604 = vsel %vm588, %v556, 0.0
        %v605 = vsel %vm589, %v557, 0.0
        %v606 = vsel %vm590, %v558, 0.0
        %v607 = vsel %vm591, %v559, 0.0
        %v608 = vsel %vm592, %v560, 0.0
        %v609 = vsel %vm593, %v561, 0.0
        %v610 = vsel %vm594, %v562, 0.0
        %v611 = vsel %vm595, %v563, 0.0
        %v612 = vsel %vm596, %v564, 0.0
        %v613 = vsel %vm597, %v565, 0.0
        %v614 = vsel %vm598, %v566, 0.0
        %v615 = vsel %vm599, %v567, 0.0
        %v616 = vsel %vm600, %v568, 0.0
        %v617 = vld [vmem:[#allocation7] sm:$0xff]
        %v618 = vld [vmem:[#allocation7 + $0x8] sm:$0xff]
        %v619 = vld [vmem:[#allocation7 + $0x10] sm:$0xff]
        %v620 = vld [vmem:[#allocation7 + $0x18] sm:$0xff]
        %v621 = vld [vmem:[#allocation7 + $0x20] sm:$0xff]
        %v622 = vld [vmem:[#allocation7 + $0x28] sm:$0xff]
        %v623 = vld [vmem:[#allocation7 + $0x30] sm:$0xff]
        %v624 = vld [vmem:[#allocation7 + $0x38] sm:$0xff]
        %v625 = vld [vmem:[#allocation7 + $0x40] sm:$0xff]
        %v626 = vld [vmem:[#allocation7 + $0x48] sm:$0xff]
        %v627 = vld [vmem:[#allocation7 + $0x50] sm:$0xff]
        %v628 = vld [vmem:[#allocation7 + $0x58] sm:$0xff]
        %v629 = vld [vmem:[#allocation7 + $0x60] sm:$0xff]
        %v630 = vld [vmem:[#allocation7 + $0x68] sm:$0xff]
        %v631 = vld [vmem:[#allocation7 + $0x70] sm:$0xff]
        %v632 = vld [vmem:[#allocation7 + $0x78] sm:$0xff]
        %v633 = vld [vmem:[#allocation8] sm:$0xff]
        %v634 = vld [vmem:[#allocation8 + $0x8] sm:$0xff]
        %v635 = vld [vmem:[#allocation8 + $0x10] sm:$0xff]
        %v636 = vld [vmem:[#allocation8 + $0x18] sm:$0xff]
        %v637 = vld [vmem:[#allocation8 + $0x20] sm:$0xff]
        %v638 = vld [vmem:[#allocation8 + $0x28] sm:$0xff]
        %v639 = vld [vmem:[#allocation8 + $0x30] sm:$0xff]
        %v640 = vld [vmem:[#allocation8 + $0x38] sm:$0xff]
        %v641 = vld [vmem:[#allocation8 + $0x40] sm:$0xff]
        %v642 = vld [vmem:[#allocation8 + $0x48] sm:$0xff]
        %v643 = vld [vmem:[#allocation8 + $0x50] sm:$0xff]
        %v644 = vld [vmem:[#allocation8 + $0x58] sm:$0xff]
        %v645 = vld [vmem:[#allocation8 + $0x60] sm:$0xff]
        %v646 = vld [vmem:[#allocation8 + $0x68] sm:$0xff]
        %v647 = vld [vmem:[#allocation8 + $0x70] sm:$0xff]
        %v648 = vld [vmem:[#allocation8 + $0x78] sm:$0xff]
        %649 = vmatpush.msra.mxu0 %v632
        %650 = vmatpush.msra.mxu0 %v631
        %651 = vmatpush.msra.mxu0 %v630
        %652 = vmatpush.msra.mxu0 %v629
        %653 = vmatpush.msra.mxu0 %v628
        %654 = vmatpush.msra.mxu0 %v627
        %655 = vmatpush.msra.mxu0 %v626
        %656 = vmatpush.msra.mxu0 %v625
        %657 = vmatpush.msra.mxu0 %v624
        %658 = vmatpush.msra.mxu0 %v623
        %659 = vmatpush.msra.mxu0 %v622
        %660 = vmatpush.msra.mxu0 %v621
        %661 = vmatpush.msra.mxu0 %v620
        %662 = vmatpush.msra.mxu0 %v619
        %663 = vmatpush.msra.mxu0 %v618
        %664 = vmatpush.msra.mxu0 %v617
        %665 = vmatmul.f32.gmra.mxu0 %v601
        %v666 = vpop.f32.mrf.mxu0
        %v667 = vadd.f32 0.0, %v666
        %668 = vmatmul.f32.gmra.mxu0 %v602
        %v669 = vpop.f32.mrf.mxu0
        %v670 = vadd.f32 0.0, %v669
        %671 = vmatmul.f32.gmra.mxu0 %v603
        %v672 = vpop.f32.mrf.mxu0
        %v673 = vadd.f32 0.0, %v672
        %674 = vmatmul.f32.gmra.mxu0 %v604
        %v675 = vpop.f32.mrf.mxu0
        %v676 = vadd.f32 0.0, %v675
        %677 = vmatmul.f32.gmra.mxu0 %v605
        %v678 = vpop.f32.mrf.mxu0
        %v679 = vadd.f32 0.0, %v678
        %680 = vmatmul.f32.gmra.mxu0 %v606
        %v681 = vpop.f32.mrf.mxu0
        %v682 = vadd.f32 0.0, %v681
        %683 = vmatmul.f32.gmra.mxu0 %v607
        %v684 = vpop.f32.mrf.mxu0
        %v685 = vadd.f32 0.0, %v684
        %686 = vmatmul.f32.gmra.mxu0 %v608
        %v687 = vpop.f32.mrf.mxu0
        %v688 = vadd.f32 0.0, %v687
        %689 = vmatmul.f32.gmra.mxu0 %v609
        %v690 = vpop.f32.mrf.mxu0
        %v691 = vadd.f32 0.0, %v690
        %692 = vmatmul.f32.gmra.mxu0 %v610
        %v693 = vpop.f32.mrf.mxu0
        %v694 = vadd.f32 0.0, %v693
        %695 = vmatmul.f32.gmra.mxu0 %v611
        %v696 = vpop.f32.mrf.mxu0
        %v697 = vadd.f32 0.0, %v696
        %698 = vmatmul.f32.gmra.mxu0 %v612
        %v699 = vpop.f32.mrf.mxu0
        %v700 = vadd.f32 0.0, %v699
        %701 = vmatmul.f32.gmra.mxu0 %v613
        %v702 = vpop.f32.mrf.mxu0
        %v703 = vadd.f32 0.0, %v702
        %704 = vmatmul.f32.gmra.mxu0 %v614
        %v705 = vpop.f32.mrf.mxu0
        %v706 = vadd.f32 0.0, %v705
        %707 = vmatmul.f32.gmra.mxu0 %v615
        %v708 = vpop.f32.mrf.mxu0
        %v709 = vadd.f32 0.0, %v708
        %710 = vmatmul.f32.gmra.mxu0 %v616
        %v711 = vpop.f32.mrf.mxu0
        %v712 = vadd.f32 0.0, %v711
        %713 = vdwg.mxu0
        %714 = vmatpush.msra.mxu0 %v648
        %715 = vmatpush.msra.mxu0 %v647
        %716 = vmatpush.msra.mxu0 %v646
        %717 = vmatpush.msra.mxu0 %v645
        %718 = vmatpush.msra.mxu0 %v644
        %719 = vmatpush.msra.mxu0 %v643
        %720 = vmatpush.msra.mxu0 %v642
        %721 = vmatpush.msra.mxu0 %v641
        %722 = vmatpush.msra.mxu0 %v640
        %723 = vmatpush.msra.mxu0 %v639
        %724 = vmatpush.msra.mxu0 %v638
        %725 = vmatpush.msra.mxu0 %v637
        %726 = vmatpush.msra.mxu0 %v636
        %727 = vmatpush.msra.mxu0 %v635
        %728 = vmatpush.msra.mxu0 %v634
        %729 = vmatpush.msra.mxu0 %v633
        %730 = vmatmul.f32.gmra.mxu0 %v569
        %v731 = vpop.f32.mrf.mxu0
        %v732 = vadd.f32 %v667, %v731
        %733 = vmatmul.f32.gmra.mxu0 %v570
        %v734 = vpop.f32.mrf.mxu0
        %v735 = vadd.f32 %v670, %v734
        %736 = vmatmul.f32.gmra.mxu0 %v571
        %v737 = vpop.f32.mrf.mxu0
        %v738 = vadd.f32 %v673, %v737
        %739 = vmatmul.f32.gmra.mxu0 %v572
        %v740 = vpop.f32.mrf.mxu0
        %v741 = vadd.f32 %v676, %v740
        %742 = vmatmul.f32.gmra.mxu0 %v573
        %v743 = vpop.f32.mrf.mxu0
        %v744 = vadd.f32 %v679, %v743
        %745 = vmatmul.f32.gmra.mxu0 %v574
        %v746 = vpop.f32.mrf.mxu0
        %v747 = vadd.f32 %v682, %v746
        %748 = vmatmul.f32.gmra.mxu0 %v575
        %v749 = vpop.f32.mrf.mxu0
        %v750 = vadd.f32 %v685, %v749
        %751 = vmatmul.f32.gmra.mxu0 %v576
        %v752 = vpop.f32.mrf.mxu0
        %v753 = vadd.f32 %v688, %v752
        %754 = vmatmul.f32.gmra.mxu0 %v577
        %v755 = vpop.f32.mrf.mxu0
        %v756 = vadd.f32 %v691, %v755
        %757 = vmatmul.f32.gmra.mxu0 %v578
        %v758 = vpop.f32.mrf.mxu0
        %v759 = vadd.f32 %v694, %v758
        %760 = vmatmul.f32.gmra.mxu0 %v579
        %v761 = vpop.f32.mrf.mxu0
        %v762 = vadd.f32 %v697, %v761
        %763 = vmatmul.f32.gmra.mxu0 %v580
        %v764 = vpop.f32.mrf.mxu0
        %v765 = vadd.f32 %v700, %v764
        %766 = vmatmul.f32.gmra.mxu0 %v581
        %v767 = vpop.f32.mrf.mxu0
        %v768 = vadd.f32 %v703, %v767
        %769 = vmatmul.f32.gmra.mxu0 %v582
        %v770 = vpop.f32.mrf.mxu0
        %v771 = vadd.f32 %v706, %v770
        %772 = vmatmul.f32.gmra.mxu0 %v583
        %v773 = vpop.f32.mrf.mxu0
        %v774 = vadd.f32 %v709, %v773
        %775 = vmatmul.f32.gmra.mxu0 %v584
        %v776 = vpop.f32.mrf.mxu0
        %v777 = vadd.f32 %v712, %v776
        %778 = vdwg.mxu0
        %v779 = vld [vmem:[%s6] sm:$0x1]
        %v781 = vperm.slane %v779, 0
        %v783 = vadd.f32 %v732, %v781
        %v784 = vadd.f32 %v735, %v781
        %v785 = vadd.f32 %v738, %v781
        %v786 = vadd.f32 %v741, %v781
        %v787 = vadd.f32 %v744, %v781
        %v788 = vadd.f32 %v747, %v781
        %v789 = vadd.f32 %v750, %v781
        %v790 = vadd.f32 %v753, %v781
        %v791 = vadd.f32 %v756, %v781
        %v792 = vadd.f32 %v759, %v781
        %v793 = vadd.f32 %v762, %v781
        %v794 = vadd.f32 %v765, %v781
        %v795 = vadd.f32 %v768, %v781
        %v796 = vadd.f32 %v771, %v781
        %v797 = vadd.f32 %v774, %v781
        %v798 = vadd.f32 %v777, %v781
        %799 = vst [vmem:[%s348] sm:$0xff] %v783
        %800 = vst [vmem:[%s348 + $0x8] sm:$0xff] %v784
        %801 = vst [vmem:[%s348 + $0x10] sm:$0xff] %v785
        %802 = vst [vmem:[%s348 + $0x18] sm:$0xff] %v786
        %803 = vst [vmem:[%s348 + $0x20] sm:$0xff] %v787
        %804 = vst [vmem:[%s348 + $0x28] sm:$0xff] %v788
        %805 = vst [vmem:[%s348 + $0x30] sm:$0xff] %v789
        %806 = vst [vmem:[%s348 + $0x38] sm:$0xff] %v790
        %807 = vst [vmem:[%s348 + $0x40] sm:$0xff] %v791
        %808 = vst [vmem:[%s348 + $0x48] sm:$0xff] %v792
        %809 = vst [vmem:[%s348 + $0x50] sm:$0xff] %v793
        %810 = vst [vmem:[%s348 + $0x58] sm:$0xff] %v794
        %811 = vst [vmem:[%s348 + $0x60] sm:$0xff] %v795
        %812 = vst [vmem:[%s348 + $0x68] sm:$0xff] %v796
        %813 = vst [vmem:[%s348 + $0x70] sm:$0xff] %v797
        %814 = vst [vmem:[%s348 + $0x78] sm:$0xff] %v798
        %s815 = sand.u32 %s186, 1
        %s816 = scalar_lea.sflag [#allocation4], %s815
        %s817 = sand.u32 %s186, 1
        %s818 = smul.addr %s817, 128
        %s819 = scalar_lea.vmem [#allocation10], %s818
        // Predicated region
        $region65: #{tpu_custom_call.1} parent=47 // pred_check
          %p820 = pneg %p196
        $region66: #{tpu_custom_call.1} parent=47 // pred_check_branch
          %822 = sbr.rel (%p820) target = $region68
        $region67: #{tpu_custom_call.1} parent=47 // pred_region
          %s823 = smul.u32 16, %s26
          %825 = vsyncadd %s816, 0
          %s826 = smul.addr %s823, 8
          %s827 = scalar_lea.hbm %s7, %s826
          %s828 = sshll.u32 %s819, 4
          %s829 = int_to_ptr.vmem [resolvable:$true] %s828
          %s830 = sshll.u32 %s827, 4
          %s831 = int_to_ptr.hbm [resolvable:$true] %s830
          %836 = dma.vmem_to_hbm [thread:$0]  %s829, 2048, %s831, %s816, 128, 128, 8
        $region68: #{tpu_custom_call.1} parent=47 // pred_fallthru
          _
      $region48: #{tpu_custom_call.1} parent=5 // pred_fallthru
        _
      %p837 = scmp.le.s32.totalorder 2, %s21
      // Predicated region
      $region69: #{tpu_custom_call.1} parent=5 // pred_check
        %p838 = pneg %p837
      $region70: #{tpu_custom_call.1} parent=5 // pred_check_branch
        %840 = sbr.rel (%p838) target = $region72
      $region71: #{tpu_custom_call.1} parent=5 // pred_region
        %s841 = ssub.s32 %s21, 2
        // Predicated region
        $region73: #{tpu_custom_call.1} parent=71 // pred_check
          %p842 = pneg %p202
        $region74: #{tpu_custom_call.1} parent=71 // pred_check_branch
          %844 = sbr.rel (%p842) target = $region76
        $region75: #{tpu_custom_call.1} parent=71 // pred_region
          %s845 = sand.u32 %s187, 1
          %s846 = scalar_lea.sflag [#allocation4], %s845
          %s847 = sand.u32 %s187, 1
          %s848 = smul.addr %s847, 128
          %s849 = scalar_lea.vmem [#allocation10], %s848
          %851 = dma.done %s846, 2048
        $region76: #{tpu_custom_call.1} parent=71 // pred_fallthru
          _
      $region72: #{tpu_custom_call.1} parent=5 // pred_fallthru
        _
    $region6: #{tpu_custom_call.1} parent=1 // loop_footer
      %s25 = sadd.s32 1, %s21
    $region7: #{tpu_custom_call.1} parent=1 // loop_footer_branch
      %20 = sbr.rel target = $region3
    $region8: #{tpu_custom_call.1} parent=1 // loop_exit
      _
    %852 = vsyncpa [#allocation3], 1
    %s853 = scalar_lea.sflag [#allocation3], 1
    %854 = vsyncpa %s853, 1
    %855 = vsyncpa [#allocation6], 1
    %856 = vsyncpa [#allocation9], 1
    %857 = vsyncpa [#allocation4], 1
    %s858 = scalar_lea.sflag [#allocation4], 1
    %859 = vsyncpa %s858, 1

</llo_original>
